<compile_context>
chip_gen: v5e
topology: v5e:2x2
jax: 0.10.0
libtpu: 0.0.40
codegen_flags: <defaults>
</compile_context>

<pallas_src>
import jax
import jax.numpy as jnp
from jax.experimental import pallas as pl
from jax.experimental.pallas import tpu as pltpu


def _physical_vmem_bytes():
    """Per-TensorCore physical VMEM; conservative (v7x) fallback."""
    try:
        return int(pltpu.get_tpu_info().vmem_capacity_bytes)
    except Exception:
        return 64 * 1024 * 1024


def _make_conv1x1_kernel(batch_block):
    def kernel(w_ref, x_ref, o_ref):
        # w_ref: (Cout, Cin)   x_ref: (B, Cin, thw)   o_ref: (B, Cout, thw)
        w = w_ref[...]
        for b in range(batch_block):  # short static unroll, B <= 16
            o_ref[b] = jnp.dot(
                w, x_ref[b], preferred_element_type=jnp.float32
            ).astype(o_ref.dtype)
    return kernel


def _plan_tiles(N, Cin, Cout, HW, budget_bytes, in_b, out_b):
    """Pick (batch block B, spatial tile thw, grid dims) from a VMEM budget.

    Per-step VMEM need ~= 2*B*thw*(Cin*in_b + Cout*out_b)  (double-buffered
    activation + output blocks) + Cout*Cin*in_b (resident weight).
    """
    w_bytes = Cout * Cin * in_b
    per_col = 2 * (Cin * in_b + Cout * out_b)
    avail = max(budget_bytes - 2 * w_bytes, per_col * 128)
    max_cols = max(128, avail // per_col)          # B*thw columns per step

    # Spatial tile: full extent if it fits, else the largest multiple of 128
    # within budget (partial last block; no cliff down to 128 lanes).
    lane_cap = max(128, (max_cols // 128) * 128)
    thw = HW if HW <= lane_cap else lane_cap
    n_spatial = pl.cdiv(HW, thw)

    # Batch-block small feature maps so each step moves >= ~1024 columns.
    if thw >= 1024:
        bb = 1
    else:
        bb = int(min(N, max_cols // max(thw, 1), pl.cdiv(1024, thw), 16))
        bb = max(bb, 1)
        while N % bb:
            bb -= 1
    n_batch = N // bb

    # Megacore: guarantee >= 2 grid blocks whenever the problem allows it.
    if n_batch * n_spatial < 2:
        if N >= 2:
            bb = max(1, N // 2)
            while N % bb:
                bb -= 1
            n_batch = N // bb
        elif HW >= 256:
            thw = max(128, ((HW // 2) // 128) * 128)
            n_spatial = pl.cdiv(HW, thw)
    return bb, thw, n_batch, n_spatial


def dim_reduce_forward(x_nchw, weight, *, compute_dtype=None):
    """Equivalent of DimReduceLayer.forward: 1x1 Conv2d, stride 1, no bias.

    x_nchw: (N, Cin, H, W)
    weight: (Cout, Cin)   (PyTorch Conv2d weight (Cout, Cin, 1, 1) squeezed)
    compute_dtype: optional narrower dtype (e.g. jnp.bfloat16) for the
        HBM-bound traffic; accumulation stays f32, output keeps x's dtype.
    """
    N, Cin, H, W = x_nchw.shape
    Cout = weight.shape[0]
    HW = H * W
    out_dtype = x_nchw.dtype

    x = x_nchw.reshape(N, Cin, HW)                 # contiguous, free reshape
    if compute_dtype is not None and jnp.dtype(compute_dtype) != jnp.dtype(x.dtype):
        x = x.astype(compute_dtype)
        weight = weight.astype(compute_dtype)

    in_b = jnp.dtype(x.dtype).itemsize
    out_b = jnp.dtype(out_dtype).itemsize

    phys_vmem = _physical_vmem_bytes()
    budget = int(phys_vmem * 0.70)                 # ~45 MiB on v7x, ~90 MiB on v5e/v6e
    bb, thw, n_batch, n_spatial = _plan_tiles(N, Cin, Cout, HW, budget, in_b, out_b)

    # VMEM actually used per step (counting weight double-buffered covers the
    # fallback path); set the scoped limit with headroom under physical VMEM.
    need = 2 * bb * thw * (Cin * in_b + Cout * out_b) + 2 * Cout * Cin * in_b
    vmem_limit = max(32 << 20, min(int(need) + (8 << 20), int(phys_vmem * 0.90)))

    cost = pl.CostEstimate(
        flops=2 * N * HW * Cin * Cout,
        transcendentals=0,
        bytes_accessed=N * HW * (Cin * in_b + Cout * out_b) + Cin * Cout * in_b,
    )

    kernel = _make_conv1x1_kernel(bb)

    def build(single_buffer_weight):
        w_kwargs = {}
        if single_buffer_weight:
            # Constant index_map -> the weight is DMA'd once; single-buffering
            # frees Cout*Cin*in_b bytes of VMEM at zero perf cost.
            w_kwargs["pipeline_mode"] = pl.Buffered(1)
        return pl.pallas_call(
            kernel,
            out_shape=jax.ShapeDtypeStruct((N, Cout, HW), out_dtype),
            grid_spec=pltpu.PrefetchScalarGridSpec(
                num_scalar_prefetch=0,
                grid=(n_batch, n_spatial),
                in_specs=[
                    # Weight: resident in VMEM across the whole grid.
                    pl.BlockSpec((Cout, Cin), lambda n, j: (0, 0), **w_kwargs),
                    # Activations: spatial axis on lanes (lane-dense loads).
                    pl.BlockSpec((bb, Cin, thw), lambda n, j: (n, 0, j)),
                ],
                # Output: spatial tile on lanes -> unmasked full-lane stores
                # (masked only on a partial last spatial tile).
                out_specs=pl.BlockSpec((bb, Cout, thw), lambda n, j: (n, 0, j)),
            ),
            compiler_params=pltpu.CompilerParams(
                dimension_semantics=("parallel", "parallel"),
                vmem_limit_bytes=int(vmem_limit),
            ),
            cost_estimate=cost,
        )

    try:
        out = build(single_buffer_weight=True)(weight, x)
    except Exception:
        # Some JAX versions may reject buffer_count=1; default buffering is
        # functionally identical (weight is tiny relative to the budget).
        out = build(single_buffer_weight=False)(weight, x)

    return out.reshape(N, Cout, H, W)


if __name__ == "__main__":
    key = jax.random.PRNGKey(0)
    k_x, k_w = jax.random.split(key)

    N, Cin, H, W = 2, 4, 16, 16
    Cout = 8

    x = jax.random.normal(k_x, (N, Cin, H, W), dtype=jnp.float32)
    # Conv2d weight (Cout, Cin, 1, 1) squeezed to (Cout, Cin).
    weight = jax.random.normal(k_w, (Cout, Cin), dtype=jnp.float32) * 0.1

    out = dim_reduce_forward(x, weight)
    out = jax.block_until_ready(out)

    # Reference: plain JAX 1x1 conv = contraction over the channel axis.
    ref = jnp.einsum("nchw,oc->nohw", x, weight)
    assert out.shape == (N, Cout, H, W)
    assert jnp.allclose(out, ref, atol=1e-5, rtol=1e-5)

    print("KERNEL_OK")
</pallas_src>

<mosaic_0001>
module attributes {stable_mosaic.version = 11 : i64} {
  func.func @kernel(%arg0: i32, %arg1: i32, %arg2: memref<8x4xf32, #tpu.memory_space<vmem>>, %arg3: memref<1x4x256xf32, #tpu.memory_space<vmem>>, %arg4: memref<1x8x256xf32, #tpu.memory_space<vmem>>) attributes {dimension_semantics = [#tpu.dimension_semantics<parallel>, #tpu.dimension_semantics<parallel>], iteration_bounds = array<i64: 2, 1>, scalar_prefetch = 0 : i64, scratch_operands = 0 : i64, tpu.core_type = #tpu.core_type<tc>, window_params = [{pipeline_mode = #tpu.pipeline_mode<synchronous>, transform_indices = @transform_0, window_bounds = array<i64: 8, 4>}, {transform_indices = @transform_1, window_bounds = array<i64: 1, 4, 256>}, {transform_indices = @transform_2, window_bounds = array<i64: 1, 8, 256>}]} {
    %c0 = arith.constant 0 : index
    %c0_0 = arith.constant 0 : index
    %0 = vector.load %arg2[%c0, %c0_0] : memref<8x4xf32, #tpu.memory_space<vmem>>, vector<8x4xf32>
    %c0_1 = arith.constant 0 : index
    %c0_2 = arith.constant 0 : index
    %c0_3 = arith.constant 0 : index
    %1 = vector.load %arg3[%c0_1, %c0_2, %c0_3] : memref<1x4x256xf32, #tpu.memory_space<vmem>>, vector<1x4x256xf32>
    %2 = vector.shape_cast %1 : vector<1x4x256xf32> to vector<4x256xf32>
    %cst = arith.constant dense<0.000000e+00> : vector<8x256xf32>
    %3 = tpu.matmul %0, %2, %cst {dimension_numbers = #tpu.dot_dimension_numbers<[1], [0], [0], [1], [0, 0, 1, 1], [], []>} : vector<8x4xf32>, vector<4x256xf32>, vector<8x256xf32> -> vector<8x256xf32>
    %c0_4 = arith.constant 0 : index
    %c0_5 = arith.constant 0 : index
    %c0_6 = arith.constant 0 : index
    %4 = vector.load %arg4[%c0_4, %c0_5, %c0_6] : memref<1x8x256xf32, #tpu.memory_space<vmem>>, vector<1x8x256xf32>
    %5 = vector.shape_cast %4 : vector<1x8x256xf32> to vector<8x256xf32>
    %6 = vector.shape_cast %3 : vector<8x256xf32> to vector<1x8x256xf32>
    tpu.vector_store %arg4[%c0_4, %c0_5, %c0_6], %6 {strides = array<i32>} : memref<1x8x256xf32, #tpu.memory_space<vmem>>, vector<1x8x256xf32>,
    return
  }
  func.func @transform_0(%arg0: i32, %arg1: i32) -> (i32, i32) {
    %c0_i32 = arith.constant 0 : i32
    %c0_i32_0 = arith.constant 0 : i32
    %c0_i32_1 = arith.constant 0 : i32
    return %c0_i32, %c0_i32_0 : i32, i32
  }
  func.func @transform_1(%arg0: i32, %arg1: i32) -> (i32, i32, i32) {
    %c0_i32 = arith.constant 0 : i32
    %c0_i32_0 = arith.constant 0 : i32
    return %arg0, %c0_i32, %arg1 : i32, i32, i32
  }
  func.func @transform_2(%arg0: i32, %arg1: i32) -> (i32, i32, i32) {
    %c0_i32 = arith.constant 0 : i32
    %c0_i32_0 = arith.constant 0 : i32
    return %arg0, %c0_i32, %arg1 : i32, i32, i32
  }
}

module attributes {stable_mosaic.version = 11 : i64} {
  func.func @kernel(%arg0: i32, %arg1: i32, %arg2: memref<8x4xf32, #tpu.memory_space<vmem>>, %arg3: memref<1x4x256xf32, #tpu.memory_space<vmem>>, %arg4: memref<1x8x256xf32, #tpu.memory_space<vmem>>) attributes {dimension_semantics = [#tpu.dimension_semantics<parallel>, #tpu.dimension_semantics<parallel>], iteration_bounds = array<i64: 2, 1>, scalar_prefetch = 0 : i64, scratch_operands = 0 : i64, tpu.core_type = #tpu.core_type<tc>, window_params = [{pipeline_mode = #tpu.pipeline_mode<synchronous>, transform_indices = @transform_0, window_bounds = array<i64: 8, 4>}, {transform_indices = @transform_1, window_bounds = array<i64: 1, 4, 256>}, {transform_indices = @transform_2, window_bounds = array<i64: 1, 8, 256>}]} {
    %c0 = arith.constant 0 : index
    %c0_0 = arith.constant 0 : index
    %0 = vector.load %arg2[%c0, %c0_0] : memref<8x4xf32, #tpu.memory_space<vmem>>, vector<8x4xf32>
    %c0_1 = arith.constant 0 : index
    %c0_2 = arith.constant 0 : index
    %c0_3 = arith.constant 0 : index
    %1 = vector.load %arg3[%c0_1, %c0_2, %c0_3] : memref<1x4x256xf32, #tpu.memory_space<vmem>>, vector<1x4x256xf32>
    %2 = vector.shape_cast %1 : vector<1x4x256xf32> to vector<4x256xf32>
    %cst = arith.constant dense<0.000000e+00> : vector<8x256xf32>
    %3 = tpu.matmul %0, %2, %cst {dimension_numbers = #tpu.dot_dimension_numbers<[1], [0], [0], [1], [0, 0, 1, 1], [], []>} : vector<8x4xf32>, vector<4x256xf32>, vector<8x256xf32> -> vector<8x256xf32>
    %c0_4 = arith.constant 0 : index
    %c0_5 = arith.constant 0 : index
    %c0_6 = arith.constant 0 : index
    %4 = vector.load %arg4[%c0_4, %c0_5, %c0_6] : memref<1x8x256xf32, #tpu.memory_space<vmem>>, vector<1x8x256xf32>
    %5 = vector.shape_cast %4 : vector<1x8x256xf32> to vector<8x256xf32>
    %6 = vector.shape_cast %3 : vector<8x256xf32> to vector<1x8x256xf32>
    tpu.vector_store %arg4[%c0_4, %c0_5, %c0_6], %6 {strides = array<i32>} : memref<1x8x256xf32, #tpu.memory_space<vmem>>, vector<1x8x256xf32>,
    return
  }
  func.func @transform_0(%arg0: i32, %arg1: i32) -> (i32, i32) {
    %c0_i32 = arith.constant 0 : i32
    %c0_i32_0 = arith.constant 0 : i32
    %c0_i32_1 = arith.constant 0 : i32
    return %c0_i32, %c0_i32_0 : i32, i32
  }
  func.func @transform_1(%arg0: i32, %arg1: i32) -> (i32, i32, i32) {
    %c0_i32 = arith.constant 0 : i32
    %c0_i32_0 = arith.constant 0 : i32
    return %arg0, %c0_i32, %arg1 : i32, i32, i32
  }
  func.func @transform_2(%arg0: i32, %arg1: i32) -> (i32, i32, i32) {
    %c0_i32 = arith.constant 0 : i32
    %c0_i32_0 = arith.constant 0 : i32
    return %arg0, %c0_i32, %arg1 : i32, i32, i32
  }
}

</mosaic_0001>

<llo_original>
// kernel: tpu_custom_call.1
$region0: #{tpu_custom_call.1}
  #allocation0 [shape = 'u32[]', space=smem, size = 0x4, offset = 0x4, fixed_abs, tag = 'smem constant byte address 0x4 - core index']
  #allocation1 [shape = 'u32[72,128]{1,0:T(1,128)}', space=vmem, size = 0x9000, scoped, tag = 'internal scratch']
  %s0 = inlined_call_operand.vmem [shape: f32[8,4], index: 0, kind: input, shape index: {}]
  %s1 = inlined_call_operand.hbm [shape: f32[2,4,256], index: 1, kind: input, shape index: {}]
  %s2 = inlined_call_operand.hbm [shape: f32[2,8,256], index: 2, kind: output, shape index: {}]
  %s3 = sld [smem:[#allocation0]]
  $region45: #{tpu_custom_call.1} parent=0
    _
  %s5 = ssub.s32 1, %s3
  %s6 = scalar_select 0, %s5, %s3
  $region1: #{tpu_custom_call.1} parent=0
    #allocation2 [shape = 'u8[8192]{0}', space=vmem, size = 0x2000, scoped, tag = 'input window, operand 1']
    #allocation3 [shape = 's32[2]{0}', space=sflag, size = 0x8, scoped, tag = 'scoped memory for tpu_custom_call.1']
    #allocation4 [shape = 's32[2]{0}', space=sflag, size = 0x8, scoped, tag = 'scoped memory for tpu_custom_call.1']
    #allocation5 [shape = 'u8[16384]{0}', space=vmem, size = 0x4000, scoped, tag = 'output window, operand 0']
    %7 = vsyncpa [#allocation3], 0
    %s8 = scalar_lea.sflag [#allocation3], 1
    %9 = vsyncpa %s8, 0
    %10 = vsyncpa [#allocation4], 0
    %s11 = scalar_lea.sflag [#allocation4], 1
    %12 = vsyncpa %s11, 0
    loop: start=0, step=1, limit=4
    $region2: #{tpu_custom_call.1} parent=1 // loop_pre_header
      _
    $region3: #{tpu_custom_call.1} parent=1 // loop_header
      %s14 = sphi 0, %s18
      %p15 = scmp.ge.s32.totalorder %s14, 4
      %s21 = sphi 0, %s33
      %s22 = sphi 0, %s29
      %s23 = sphi 0, %s21
      %s24 = sphi 0, %s22
      %s25 = sphi 0, %s23
      %s26 = sphi 0, %s24
      %s34 = sphi 0, %s34
      %s36 = sphi 0, %s34
      %s37 = sphi 0, %s36
      %s51 = sphi 0, %s37
      %s59 = sphi 0, %s61
      %s62 = sphi 0, %s59
      %s63 = sphi 0, %s62
      %s79 = sphi 0, %s63
      %s87 = sphi 0, %s89
      %s90 = sphi 0, %s87
      %s91 = sphi 0, %s90
      %s107 = sphi 0, %s91
    $region4: #{tpu_custom_call.1} parent=1 // loop_header_branch
      %17 = sbr.rel (%p15) target = $region8
    $region5: #{tpu_custom_call.1} parent=1 // loop_body
      %s19 = ssub.s32 %s14, 1
      %s20 = ssub.s32 %s14, 2
      %s27 = sadd.s32 1, %s22
      %p28 = scmp.ge.s32.totalorder %s27, 1
      %s29 = scalar_select %p28, 0, %s27
      %s30 = sadd.s32 1, %s21
      %s31 = scalar_select %p28, %s30, %s21
      %p32 = scmp.ge.s32.totalorder %s31, 2
      %s33 = scalar_select %p32, 0, %s31
      %s35 = sadd.s32 %s34, 1
      %p38 = scmp.eq.s32.totalorder %s14, 1
      %p39 = scmp.ne.s32.totalorder %s34, %s36
      %p40 = scmp.eq.s32.totalorder %s14, 0
      %p41 = por %p39, %p40
      %p42 = scmp.ne.s32.totalorder %s34, %s36
      %p43 = scmp.eq.s32.totalorder %s19, 1
      %p44 = por %p42, %p43
      %p45 = scmp.ne.s32.totalorder %s36, %s37
      %p46 = scmp.eq.s32.totalorder %s19, 0
      %p47 = por %p45, %p46
      %p48 = scmp.ne.s32.totalorder %s36, %s37
      %p49 = scmp.eq.s32.totalorder %s20, 1
      %p50 = por %p48, %p49
      %p52 = scmp.ne.s32.totalorder %s37, %s51
      %p53 = scmp.eq.s32.totalorder %s20, 0
      %p54 = por %p52, %p53
      %s55 = ssub.s32 %s21, %s33
      %s56 = ssub.s32 %s22, %s29
      %s57 = sor.u32 %s55, %s56
      %p58 = scmp.eq.s32.totalorder %s57, 0
      %s60 = sadd.s32 %s59, 1
      %s61 = scalar_select %p58, %s59, %s60
      %p64 = pneg %p58
      %p65 = scmp.eq.s32.totalorder %s14, 1
      %p66 = por %p64, %p65
      %p67 = scmp.ne.s32.totalorder %s59, %s62
      %p68 = scmp.eq.s32.totalorder %s14, 0
      %p69 = por %p67, %p68
      %p70 = scmp.ne.s32.totalorder %s59, %s62
      %p71 = scmp.eq.s32.totalorder %s19, 1
      %p72 = por %p70, %p71
      %p73 = scmp.ne.s32.totalorder %s62, %s63
      %p74 = scmp.eq.s32.totalorder %s19, 0
      %p75 = por %p73, %p74
      %p76 = scmp.ne.s32.totalorder %s62, %s63
      %p77 = scmp.eq.s32.totalorder %s20, 1
      %p78 = por %p76, %p77
      %p80 = scmp.ne.s32.totalorder %s63, %s79
      %p81 = scmp.eq.s32.totalorder %s20, 0
      %p82 = por %p80, %p81
      %s83 = ssub.s32 %s21, %s33
      %s84 = ssub.s32 %s22, %s29
      %s85 = sor.u32 %s83, %s84
      %p86 = scmp.eq.s32.totalorder %s85, 0
      %s88 = sadd.s32 %s87, 1
      %s89 = scalar_select %p86, %s87, %s88
      %p92 = pneg %p86
      %p93 = scmp.eq.s32.totalorder %s14, 1
      %p94 = por %p92, %p93
      %p95 = scmp.ne.s32.totalorder %s87, %s90
      %p96 = scmp.eq.s32.totalorder %s14, 0
      %p97 = por %p95, %p96
      %p98 = scmp.ne.s32.totalorder %s87, %s90
      %p99 = scmp.eq.s32.totalorder %s19, 1
      %p100 = por %p98, %p99
      %p101 = scmp.ne.s32.totalorder %s90, %s91
      %p102 = scmp.eq.s32.totalorder %s19, 0
      %p103 = por %p101, %p102
      %p104 = scmp.ne.s32.totalorder %s90, %s91
      %p105 = scmp.eq.s32.totalorder %s20, 1
      %p106 = por %p104, %p105
      %p108 = scmp.ne.s32.totalorder %s91, %s107
      %p109 = scmp.eq.s32.totalorder %s20, 0
      %p110 = por %p108, %p109
      %p111 = scmp.le.s32.totalorder 1, %s14
      %p112 = scmp.lt.s32.totalorder %s14, 3
      %p113 = pnand %p111, %p112
      %p114 = pneg %p113
      // Predicated region
      $region9: #{tpu_custom_call.1} parent=5 // pred_check
        _
      $region10: #{tpu_custom_call.1} parent=5 // pred_check_branch
        %116 = sbr.rel (%p113) target = $region12
      $region11: #{tpu_custom_call.1} parent=5 // pred_region
        %s117 = ssub.s32 %s14, 1
        // Predicated region
        $region13: #{tpu_custom_call.1} parent=11 // pred_check
          %p118 = pneg %p47
        $region14: #{tpu_custom_call.1} parent=11 // pred_check_branch
          %120 = sbr.rel (%p118) target = $region16
        $region15: #{tpu_custom_call.1} parent=11 // pred_region
          _
        $region16: #{tpu_custom_call.1} parent=11 // pred_fallthru
          _
      $region12: #{tpu_custom_call.1} parent=5 // pred_fallthru
        _
      %p121 = scmp.lt.s32.totalorder %s14, 2
      // Predicated region
      $region17: #{tpu_custom_call.1} parent=5 // pred_check
        %p122 = pneg %p121
      $region18: #{tpu_custom_call.1} parent=5 // pred_check_branch
        %124 = sbr.rel (%p122) target = $region20
      $region19: #{tpu_custom_call.1} parent=5 // pred_region
        // Predicated region
        $region21: #{tpu_custom_call.1} parent=19 // pred_check
          %p125 = pneg %p69
        $region22: #{tpu_custom_call.1} parent=19 // pred_check_branch
          %127 = sbr.rel (%p125) target = $region24
        $region23: #{tpu_custom_call.1} parent=19 // pred_region
          %s128 = sand.u32 %s59, 1
          %s129 = scalar_lea.sflag [#allocation3], %s128
          %s130 = sand.u32 %s59, 1
          %s131 = smul.addr %s130, 8
          %s132 = scalar_lea.vmem [#allocation2], %s131
          %s133 = smul.u32 2, %s22
          %135 = vsyncadd %s129, 0
          %s136 = smul.addr %s21, 2
          %s137 = sadd.s32 %s133, %s136
          %s138 = smul.addr %s137, 4
          %s139 = scalar_lea.hbm %s1, %s138
          %s141 = sshll.u32 %s139, 4
          %s142 = int_to_ptr.hbm [resolvable:$true] %s141
          %s143 = sshll.u32 %s132, 4
          %s144 = int_to_ptr.vmem [resolvable:$true] %s143
          %146 = dma.hbm_to_vmem [thread:$0]  %s142, 128, %s144, %s129
        $region24: #{tpu_custom_call.1} parent=19 // pred_fallthru
          _
      $region20: #{tpu_custom_call.1} parent=5 // pred_fallthru
        _
      %p147 = scmp.le.s32.totalorder 1, %s14
      %p148 = scmp.lt.s32.totalorder %s14, 3
      %p149 = pnand %p147, %p148
      %p150 = pneg %p149
      // Predicated region
      $region25: #{tpu_custom_call.1} parent=5 // pred_check
        _
      $region26: #{tpu_custom_call.1} parent=5 // pred_check_branch
        %152 = sbr.rel (%p149) target = $region28
      $region27: #{tpu_custom_call.1} parent=5 // pred_region
        %s153 = ssub.s32 %s14, 1
        %s154 = sand.u32 %s62, 1
        %s155 = scalar_lea.sflag [#allocation3], %s154
        %s156 = sand.u32 %s62, 1
        %s157 = smul.addr %s156, 8
        %s158 = scalar_lea.vmem [#allocation2], %s157
        // Predicated region
        $region29: #{tpu_custom_call.1} parent=27 // pred_check
          %p159 = pneg %p75
        $region30: #{tpu_custom_call.1} parent=27 // pred_check_branch
          %161 = sbr.rel (%p159) target = $region32
        $region31: #{tpu_custom_call.1} parent=27 // pred_region
          %163 = dma.done %s155, 128
        $region32: #{tpu_custom_call.1} parent=27 // pred_fallthru
          _
        %p164 = pneg %p47
        %p165 = pneg %p44
        %s166 = sand.u32 %s62, 1
        %s167 = scalar_lea.sflag [#allocation3], %s166
        %s168 = sand.u32 %s62, 1
        %s169 = smul.addr %s168, 8
        %s170 = scalar_lea.vmem [#allocation2], %s169
        %p171 = pneg %p75
        %p172 = pneg %p72
        %p173 = pneg %p103
        %p174 = pneg %p100
        %s175 = sand.u32 %s90, 1
        %s176 = scalar_lea.sflag [#allocation4], %s175
        %s177 = sand.u32 %s90, 1
        %s178 = smul.addr %s177, 16
        %s179 = scalar_lea.vmem [#allocation5], %s178
        %s180 = smul.u32 2, %s24
        %s181 = smul.u32 2, %s24
        %v182 = vld [vmem:[%s0] sm:$0xff]
        %v183 = vld [vmem:[%s158] sm:$0xff]
        %185 = vst [vmem:[#allocation1] ss:$2 sm:$0xff] %v183
        %v186 = vld.sshfl [vmem:[#allocation1] sm:$0xff pattern:$0x75316420]
        %v187 = vld.sshfl [vmem:[#allocation1 + $0x8] sm:$0xff pattern:$0x75316420]
        %vm188 = vcmask 31744
        %v190 = vsel %vm188, %v182, 0
        %vm192 = vcmask 1043456
        %v193 = vsel %vm192, %v186, 0
        %v195 = vsel %vm192, %v187, 0
        %197 = vmatpush.msra.mxu0 0.0
        %198 = vmatpush.msra.mxu0 0.0
        %199 = vmatpush.msra.mxu0 0.0
        %200 = vmatpush.msra.mxu0 0.0
        %201 = vmatpush.msra.mxu0 0.0
        %202 = vmatpush.msra.mxu0 0.0
        %203 = vmatpush.msra.mxu0 0.0
        %204 = vmatpush.msra.mxu0 0.0
        %205 = vmatpush.msra.mxu0 0.0
        %206 = vmatpush.msra.mxu0 0.0
        %207 = vmatpush.msra.mxu0 0.0
        %208 = vmatpush.msra.mxu0 0.0
        %209 = vmatpush.msra.mxu0 0.0
        %210 = vmatpush.msra.mxu0 0.0
        %211 = vmatpush.msra.mxu0 0.0
        %212 = vmatpush.msra.mxu0 %v193
        %213 = vmatmul.f32.gmra.mxu0 %v190
        %v214 = vpop.f32.mrf.mxu0
        %v215 = vadd.f32 0.0, %v214
        %216 = vdwg.mxu0
        %217 = vmatpush.msra.mxu0 0.0
        %218 = vmatpush.msra.mxu0 0.0
        %219 = vmatpush.msra.mxu0 0.0
        %220 = vmatpush.msra.mxu0 0.0
        %221 = vmatpush.msra.mxu0 0.0
        %222 = vmatpush.msra.mxu0 0.0
        %223 = vmatpush.msra.mxu0 0.0
        %224 = vmatpush.msra.mxu0 0.0
        %225 = vmatpush.msra.mxu0 0.0
        %226 = vmatpush.msra.mxu0 0.0
        %227 = vmatpush.msra.mxu0 0.0
        %228 = vmatpush.msra.mxu0 0.0
        %229 = vmatpush.msra.mxu0 0.0
        %230 = vmatpush.msra.mxu0 0.0
        %231 = vmatpush.msra.mxu0 0.0
        %232 = vmatpush.msra.mxu0 %v195
        %233 = vmatmul.f32.gmra.mxu0 %v190
        %v234 = vpop.f32.mrf.mxu0
        %v235 = vadd.f32 0.0, %v234
        %236 = vdwg.mxu0
        %237 = vst [vmem:[%s179] sm:$0xff] %v215
        %238 = vst [vmem:[%s179 + $0x8] sm:$0xff] %v235
        %s239 = sand.u32 %s90, 1
        %s240 = scalar_lea.sflag [#allocation4], %s239
        %s241 = sand.u32 %s90, 1
        %s242 = smul.addr %s241, 16
        %s243 = scalar_lea.vmem [#allocation5], %s242
        // Predicated region
        $region33: #{tpu_custom_call.1} parent=27 // pred_check
          %p244 = pneg %p100
        $region34: #{tpu_custom_call.1} parent=27 // pred_check_branch
          %246 = sbr.rel (%p244) target = $region36
        $region35: #{tpu_custom_call.1} parent=27 // pred_region
          %s247 = smul.u32 2, %s24
          %249 = vsyncadd %s240, 0
          %s250 = smul.addr %s23, 2
          %s251 = sadd.s32 %s247, %s250
          %s252 = smul.addr %s251, 8
          %s253 = scalar_lea.hbm %s2, %s252
          %s255 = sshll.u32 %s243, 4
          %s256 = int_to_ptr.vmem [resolvable:$true] %s255
          %s257 = sshll.u32 %s253, 4
          %s258 = int_to_ptr.hbm [resolvable:$true] %s257
          %260 = dma.vmem_to_hbm [thread:$0]  %s256, 256, %s258, %s240
        $region36: #{tpu_custom_call.1} parent=27 // pred_fallthru
          _
      $region28: #{tpu_custom_call.1} parent=5 // pred_fallthru
        _
      %p261 = scmp.le.s32.totalorder 2, %s14
      // Predicated region
      $region37: #{tpu_custom_call.1} parent=5 // pred_check
        %p262 = pneg %p261
      $region38: #{tpu_custom_call.1} parent=5 // pred_check_branch
        %264 = sbr.rel (%p262) target = $region40
      $region39: #{tpu_custom_call.1} parent=5 // pred_region
        %s265 = ssub.s32 %s14, 2
        // Predicated region
        $region41: #{tpu_custom_call.1} parent=39 // pred_check
          %p266 = pneg %p106
        $region42: #{tpu_custom_call.1} parent=39 // pred_check_branch
          %268 = sbr.rel (%p266) target = $region44
        $region43: #{tpu_custom_call.1} parent=39 // pred_region
          %s269 = sand.u32 %s91, 1
          %s270 = scalar_lea.sflag [#allocation4], %s269
          %s271 = sand.u32 %s91, 1
          %s272 = smul.addr %s271, 16
          %s273 = scalar_lea.vmem [#allocation5], %s272
          %275 = dma.done %s270, 256
        $region44: #{tpu_custom_call.1} parent=39 // pred_fallthru
          _
      $region40: #{tpu_custom_call.1} parent=5 // pred_fallthru
        _
    $region6: #{tpu_custom_call.1} parent=1 // loop_footer
      %s18 = sadd.s32 1, %s14
    $region7: #{tpu_custom_call.1} parent=1 // loop_footer_branch
      %13 = sbr.rel target = $region3
    $region8: #{tpu_custom_call.1} parent=1 // loop_exit
      _
    %276 = vsyncpa [#allocation3], 1
    %s277 = scalar_lea.sflag [#allocation3], 1
    %278 = vsyncpa %s277, 1
    %279 = vsyncpa [#allocation4], 1
    %s280 = scalar_lea.sflag [#allocation4], 1
    %281 = vsyncpa %s280, 1

// kernel: tpu_custom_call.1
$region0: #{tpu_custom_call.1}
  #allocation0 [shape = 'u32[]', space=smem, size = 0x4, offset = 0x4, fixed_abs, tag = 'smem constant byte address 0x4 - core index']
  #allocation1 [shape = 'u32[72,128]{1,0:T(1,128)}', space=vmem, size = 0x9000, scoped, tag = 'internal scratch']
  %s0 = inlined_call_operand.vmem [shape: f32[8,4], index: 0, kind: input, shape index: {}]
  %s1 = inlined_call_operand.hbm [shape: f32[2,4,256], index: 1, kind: input, shape index: {}]
  %s2 = inlined_call_operand.hbm [shape: f32[2,8,256], index: 2, kind: output, shape index: {}]
  %s3 = sld [smem:[#allocation0]]
  $region45: #{tpu_custom_call.1} parent=0
    _
  %s5 = ssub.s32 1, %s3
  %s6 = scalar_select 0, %s5, %s3
  $region1: #{tpu_custom_call.1} parent=0
    #allocation2 [shape = 'u8[8192]{0}', space=vmem, size = 0x2000, scoped, tag = 'input window, operand 1']
    #allocation3 [shape = 's32[2]{0}', space=sflag, size = 0x8, scoped, tag = 'scoped memory for tpu_custom_call.1']
    #allocation4 [shape = 's32[2]{0}', space=sflag, size = 0x8, scoped, tag = 'scoped memory for tpu_custom_call.1']
    #allocation5 [shape = 'u8[16384]{0}', space=vmem, size = 0x4000, scoped, tag = 'output window, operand 0']
    %7 = vsyncpa [#allocation3], 0
    %s8 = scalar_lea.sflag [#allocation3], 1
    %9 = vsyncpa %s8, 0
    %10 = vsyncpa [#allocation4], 0
    %s11 = scalar_lea.sflag [#allocation4], 1
    %12 = vsyncpa %s11, 0
    loop: start=0, step=1, limit=4
    $region2: #{tpu_custom_call.1} parent=1 // loop_pre_header
      _
    $region3: #{tpu_custom_call.1} parent=1 // loop_header
      %s14 = sphi 0, %s18
      %p15 = scmp.ge.s32.totalorder %s14, 4
      %s21 = sphi 0, %s33
      %s22 = sphi 0, %s29
      %s23 = sphi 0, %s21
      %s24 = sphi 0, %s22
      %s25 = sphi 0, %s23
      %s26 = sphi 0, %s24
      %s34 = sphi 0, %s34
      %s36 = sphi 0, %s34
      %s37 = sphi 0, %s36
      %s51 = sphi 0, %s37
      %s59 = sphi 0, %s61
      %s62 = sphi 0, %s59
      %s63 = sphi 0, %s62
      %s79 = sphi 0, %s63
      %s87 = sphi 0, %s89
      %s90 = sphi 0, %s87
      %s91 = sphi 0, %s90
      %s107 = sphi 0, %s91
    $region4: #{tpu_custom_call.1} parent=1 // loop_header_branch
      %17 = sbr.rel (%p15) target = $region8
    $region5: #{tpu_custom_call.1} parent=1 // loop_body
      %s19 = ssub.s32 %s14, 1
      %s20 = ssub.s32 %s14, 2
      %s27 = sadd.s32 1, %s22
      %p28 = scmp.ge.s32.totalorder %s27, 1
      %s29 = scalar_select %p28, 0, %s27
      %s30 = sadd.s32 1, %s21
      %s31 = scalar_select %p28, %s30, %s21
      %p32 = scmp.ge.s32.totalorder %s31, 2
      %s33 = scalar_select %p32, 0, %s31
      %s35 = sadd.s32 %s34, 1
      %p38 = scmp.eq.s32.totalorder %s14, 1
      %p39 = scmp.ne.s32.totalorder %s34, %s36
      %p40 = scmp.eq.s32.totalorder %s14, 0
      %p41 = por %p39, %p40
      %p42 = scmp.ne.s32.totalorder %s34, %s36
      %p43 = scmp.eq.s32.totalorder %s19, 1
      %p44 = por %p42, %p43
      %p45 = scmp.ne.s32.totalorder %s36, %s37
      %p46 = scmp.eq.s32.totalorder %s19, 0
      %p47 = por %p45, %p46
      %p48 = scmp.ne.s32.totalorder %s36, %s37
      %p49 = scmp.eq.s32.totalorder %s20, 1
      %p50 = por %p48, %p49
      %p52 = scmp.ne.s32.totalorder %s37, %s51
      %p53 = scmp.eq.s32.totalorder %s20, 0
      %p54 = por %p52, %p53
      %s55 = ssub.s32 %s21, %s33
      %s56 = ssub.s32 %s22, %s29
      %s57 = sor.u32 %s55, %s56
      %p58 = scmp.eq.s32.totalorder %s57, 0
      %s60 = sadd.s32 %s59, 1
      %s61 = scalar_select %p58, %s59, %s60
      %p64 = pneg %p58
      %p65 = scmp.eq.s32.totalorder %s14, 1
      %p66 = por %p64, %p65
      %p67 = scmp.ne.s32.totalorder %s59, %s62
      %p68 = scmp.eq.s32.totalorder %s14, 0
      %p69 = por %p67, %p68
      %p70 = scmp.ne.s32.totalorder %s59, %s62
      %p71 = scmp.eq.s32.totalorder %s19, 1
      %p72 = por %p70, %p71
      %p73 = scmp.ne.s32.totalorder %s62, %s63
      %p74 = scmp.eq.s32.totalorder %s19, 0
      %p75 = por %p73, %p74
      %p76 = scmp.ne.s32.totalorder %s62, %s63
      %p77 = scmp.eq.s32.totalorder %s20, 1
      %p78 = por %p76, %p77
      %p80 = scmp.ne.s32.totalorder %s63, %s79
      %p81 = scmp.eq.s32.totalorder %s20, 0
      %p82 = por %p80, %p81
      %s83 = ssub.s32 %s21, %s33
      %s84 = ssub.s32 %s22, %s29
      %s85 = sor.u32 %s83, %s84
      %p86 = scmp.eq.s32.totalorder %s85, 0
      %s88 = sadd.s32 %s87, 1
      %s89 = scalar_select %p86, %s87, %s88
      %p92 = pneg %p86
      %p93 = scmp.eq.s32.totalorder %s14, 1
      %p94 = por %p92, %p93
      %p95 = scmp.ne.s32.totalorder %s87, %s90
      %p96 = scmp.eq.s32.totalorder %s14, 0
      %p97 = por %p95, %p96
      %p98 = scmp.ne.s32.totalorder %s87, %s90
      %p99 = scmp.eq.s32.totalorder %s19, 1
      %p100 = por %p98, %p99
      %p101 = scmp.ne.s32.totalorder %s90, %s91
      %p102 = scmp.eq.s32.totalorder %s19, 0
      %p103 = por %p101, %p102
      %p104 = scmp.ne.s32.totalorder %s90, %s91
      %p105 = scmp.eq.s32.totalorder %s20, 1
      %p106 = por %p104, %p105
      %p108 = scmp.ne.s32.totalorder %s91, %s107
      %p109 = scmp.eq.s32.totalorder %s20, 0
      %p110 = por %p108, %p109
      %p111 = scmp.le.s32.totalorder 1, %s14
      %p112 = scmp.lt.s32.totalorder %s14, 3
      %p113 = pnand %p111, %p112
      %p114 = pneg %p113
      // Predicated region
      $region9: #{tpu_custom_call.1} parent=5 // pred_check
        _
      $region10: #{tpu_custom_call.1} parent=5 // pred_check_branch
        %116 = sbr.rel (%p113) target = $region12
      $region11: #{tpu_custom_call.1} parent=5 // pred_region
        %s117 = ssub.s32 %s14, 1
        // Predicated region
        $region13: #{tpu_custom_call.1} parent=11 // pred_check
          %p118 = pneg %p47
        $region14: #{tpu_custom_call.1} parent=11 // pred_check_branch
          %120 = sbr.rel (%p118) target = $region16
        $region15: #{tpu_custom_call.1} parent=11 // pred_region
          _
        $region16: #{tpu_custom_call.1} parent=11 // pred_fallthru
          _
      $region12: #{tpu_custom_call.1} parent=5 // pred_fallthru
        _
      %p121 = scmp.lt.s32.totalorder %s14, 2
      // Predicated region
      $region17: #{tpu_custom_call.1} parent=5 // pred_check
        %p122 = pneg %p121
      $region18: #{tpu_custom_call.1} parent=5 // pred_check_branch
        %124 = sbr.rel (%p122) target = $region20
      $region19: #{tpu_custom_call.1} parent=5 // pred_region
        // Predicated region
        $region21: #{tpu_custom_call.1} parent=19 // pred_check
          %p125 = pneg %p69
        $region22: #{tpu_custom_call.1} parent=19 // pred_check_branch
          %127 = sbr.rel (%p125) target = $region24
        $region23: #{tpu_custom_call.1} parent=19 // pred_region
          %s128 = sand.u32 %s59, 1
          %s129 = scalar_lea.sflag [#allocation3], %s128
          %s130 = sand.u32 %s59, 1
          %s131 = smul.addr %s130, 8
          %s132 = scalar_lea.vmem [#allocation2], %s131
          %s133 = smul.u32 2, %s22
          %135 = vsyncadd %s129, 0
          %s136 = smul.addr %s21, 2
          %s137 = sadd.s32 %s133, %s136
          %s138 = smul.addr %s137, 4
          %s139 = scalar_lea.hbm %s1, %s138
          %s141 = sshll.u32 %s139, 4
          %s142 = int_to_ptr.hbm [resolvable:$true] %s141
          %s143 = sshll.u32 %s132, 4
          %s144 = int_to_ptr.vmem [resolvable:$true] %s143
          %146 = dma.hbm_to_vmem [thread:$0]  %s142, 128, %s144, %s129
        $region24: #{tpu_custom_call.1} parent=19 // pred_fallthru
          _
      $region20: #{tpu_custom_call.1} parent=5 // pred_fallthru
        _
      %p147 = scmp.le.s32.totalorder 1, %s14
      %p148 = scmp.lt.s32.totalorder %s14, 3
      %p149 = pnand %p147, %p148
      %p150 = pneg %p149
      // Predicated region
      $region25: #{tpu_custom_call.1} parent=5 // pred_check
        _
      $region26: #{tpu_custom_call.1} parent=5 // pred_check_branch
        %152 = sbr.rel (%p149) target = $region28
      $region27: #{tpu_custom_call.1} parent=5 // pred_region
        %s153 = ssub.s32 %s14, 1
        %s154 = sand.u32 %s62, 1
        %s155 = scalar_lea.sflag [#allocation3], %s154
        %s156 = sand.u32 %s62, 1
        %s157 = smul.addr %s156, 8
        %s158 = scalar_lea.vmem [#allocation2], %s157
        // Predicated region
        $region29: #{tpu_custom_call.1} parent=27 // pred_check
          %p159 = pneg %p75
        $region30: #{tpu_custom_call.1} parent=27 // pred_check_branch
          %161 = sbr.rel (%p159) target = $region32
        $region31: #{tpu_custom_call.1} parent=27 // pred_region
          %163 = dma.done %s155, 128
        $region32: #{tpu_custom_call.1} parent=27 // pred_fallthru
          _
        %p164 = pneg %p47
        %p165 = pneg %p44
        %s166 = sand.u32 %s62, 1
        %s167 = scalar_lea.sflag [#allocation3], %s166
        %s168 = sand.u32 %s62, 1
        %s169 = smul.addr %s168, 8
        %s170 = scalar_lea.vmem [#allocation2], %s169
        %p171 = pneg %p75
        %p172 = pneg %p72
        %p173 = pneg %p103
        %p174 = pneg %p100
        %s175 = sand.u32 %s90, 1
        %s176 = scalar_lea.sflag [#allocation4], %s175
        %s177 = sand.u32 %s90, 1
        %s178 = smul.addr %s177, 16
        %s179 = scalar_lea.vmem [#allocation5], %s178
        %s180 = smul.u32 2, %s24
        %s181 = smul.u32 2, %s24
        %v182 = vld [vmem:[%s0] sm:$0xff]
        %v183 = vld [vmem:[%s158] sm:$0xff]
        %185 = vst [vmem:[#allocation1] ss:$2 sm:$0xff] %v183
        %v186 = vld.sshfl [vmem:[#allocation1] sm:$0xff pattern:$0x75316420]
        %v187 = vld.sshfl [vmem:[#allocation1 + $0x8] sm:$0xff pattern:$0x75316420]
        %vm188 = vcmask 31744
        %v190 = vsel %vm188, %v182, 0
        %vm192 = vcmask 1043456
        %v193 = vsel %vm192, %v186, 0
        %v195 = vsel %vm192, %v187, 0
        %197 = vmatpush.msra.mxu0 0.0
        %198 = vmatpush.msra.mxu0 0.0
        %199 = vmatpush.msra.mxu0 0.0
        %200 = vmatpush.msra.mxu0 0.0
        %201 = vmatpush.msra.mxu0 0.0
        %202 = vmatpush.msra.mxu0 0.0
        %203 = vmatpush.msra.mxu0 0.0
        %204 = vmatpush.msra.mxu0 0.0
        %205 = vmatpush.msra.mxu0 0.0
        %206 = vmatpush.msra.mxu0 0.0
        %207 = vmatpush.msra.mxu0 0.0
        %208 = vmatpush.msra.mxu0 0.0
        %209 = vmatpush.msra.mxu0 0.0
        %210 = vmatpush.msra.mxu0 0.0
        %211 = vmatpush.msra.mxu0 0.0
        %212 = vmatpush.msra.mxu0 %v193
        %213 = vmatmul.f32.gmra.mxu0 %v190
        %v214 = vpop.f32.mrf.mxu0
        %v215 = vadd.f32 0.0, %v214
        %216 = vdwg.mxu0
        %217 = vmatpush.msra.mxu0 0.0
        %218 = vmatpush.msra.mxu0 0.0
        %219 = vmatpush.msra.mxu0 0.0
        %220 = vmatpush.msra.mxu0 0.0
        %221 = vmatpush.msra.mxu0 0.0
        %222 = vmatpush.msra.mxu0 0.0
        %223 = vmatpush.msra.mxu0 0.0
        %224 = vmatpush.msra.mxu0 0.0
        %225 = vmatpush.msra.mxu0 0.0
        %226 = vmatpush.msra.mxu0 0.0
        %227 = vmatpush.msra.mxu0 0.0
        %228 = vmatpush.msra.mxu0 0.0
        %229 = vmatpush.msra.mxu0 0.0
        %230 = vmatpush.msra.mxu0 0.0
        %231 = vmatpush.msra.mxu0 0.0
        %232 = vmatpush.msra.mxu0 %v195
        %233 = vmatmul.f32.gmra.mxu0 %v190
        %v234 = vpop.f32.mrf.mxu0
        %v235 = vadd.f32 0.0, %v234
        %236 = vdwg.mxu0
        %237 = vst [vmem:[%s179] sm:$0xff] %v215
        %238 = vst [vmem:[%s179 + $0x8] sm:$0xff] %v235
        %s239 = sand.u32 %s90, 1
        %s240 = scalar_lea.sflag [#allocation4], %s239
        %s241 = sand.u32 %s90, 1
        %s242 = smul.addr %s241, 16
        %s243 = scalar_lea.vmem [#allocation5], %s242
        // Predicated region
        $region33: #{tpu_custom_call.1} parent=27 // pred_check
          %p244 = pneg %p100
        $region34: #{tpu_custom_call.1} parent=27 // pred_check_branch
          %246 = sbr.rel (%p244) target = $region36
        $region35: #{tpu_custom_call.1} parent=27 // pred_region
          %s247 = smul.u32 2, %s24
          %249 = vsyncadd %s240, 0
          %s250 = smul.addr %s23, 2
          %s251 = sadd.s32 %s247, %s250
          %s252 = smul.addr %s251, 8
          %s253 = scalar_lea.hbm %s2, %s252
          %s255 = sshll.u32 %s243, 4
          %s256 = int_to_ptr.vmem [resolvable:$true] %s255
          %s257 = sshll.u32 %s253, 4
          %s258 = int_to_ptr.hbm [resolvable:$true] %s257
          %260 = dma.vmem_to_hbm [thread:$0]  %s256, 256, %s258, %s240
        $region36: #{tpu_custom_call.1} parent=27 // pred_fallthru
          _
      $region28: #{tpu_custom_call.1} parent=5 // pred_fallthru
        _
      %p261 = scmp.le.s32.totalorder 2, %s14
      // Predicated region
      $region37: #{tpu_custom_call.1} parent=5 // pred_check
        %p262 = pneg %p261
      $region38: #{tpu_custom_call.1} parent=5 // pred_check_branch
        %264 = sbr.rel (%p262) target = $region40
      $region39: #{tpu_custom_call.1} parent=5 // pred_region
        %s265 = ssub.s32 %s14, 2
        // Predicated region
        $region41: #{tpu_custom_call.1} parent=39 // pred_check
          %p266 = pneg %p106
        $region42: #{tpu_custom_call.1} parent=39 // pred_check_branch
          %268 = sbr.rel (%p266) target = $region44
        $region43: #{tpu_custom_call.1} parent=39 // pred_region
          %s269 = sand.u32 %s91, 1
          %s270 = scalar_lea.sflag [#allocation4], %s269
          %s271 = sand.u32 %s91, 1
          %s272 = smul.addr %s271, 16
          %s273 = scalar_lea.vmem [#allocation5], %s272
          %275 = dma.done %s270, 256
        $region44: #{tpu_custom_call.1} parent=39 // pred_fallthru
          _
      $region40: #{tpu_custom_call.1} parent=5 // pred_fallthru
        _
    $region6: #{tpu_custom_call.1} parent=1 // loop_footer
      %s18 = sadd.s32 1, %s14
    $region7: #{tpu_custom_call.1} parent=1 // loop_footer_branch
      %13 = sbr.rel target = $region3
    $region8: #{tpu_custom_call.1} parent=1 // loop_exit
      _
    %276 = vsyncpa [#allocation3], 1
    %s277 = scalar_lea.sflag [#allocation3], 1
    %278 = vsyncpa %s277, 1
    %279 = vsyncpa [#allocation4], 1
    %s280 = scalar_lea.sflag [#allocation4], 1
    %281 = vsyncpa %s280, 1

</llo_original>
